<compile_context>
chip_gen: v5e
topology: v5e:2x2
jax: 0.10.0
libtpu: 0.0.40
codegen_flags: <defaults>
</compile_context>

<pallas_src>
import functools

import jax
import jax.numpy as jnp
from jax.experimental import pallas as pl
from jax.experimental.pallas import tpu as pltpu


def _round_up(x, m):
    return ((x + m - 1) // m) * m


def _sublane_align(dtype):
    # Sublane tiling by element width: f32 -> 8, bf16 -> 16, int8/fp8 -> 32.
    itemsize = jnp.dtype(dtype).itemsize
    return {4: 8, 2: 16, 1: 32}.get(itemsize, 8)


def _largest_aligned_divisor(n, align, cap):
    """Largest multiple of `align` that divides n and is <= cap, else None."""
    d = (cap // align) * align
    while d >= align:
        if n % d == 0:
            return d
        d -= align
    return None


def _pick_dim(size, align, cap):
    """Return (tile, padded_size). Prefers no padding: full extent if it fits
    the cap (legal regardless of alignment), else an exact aligned divisor,
    else pad up to a multiple of `cap` (rare)."""
    if size <= cap:
        return size, size
    d = _largest_aligned_divisor(size, align, cap)
    if d is not None:
        return d, size
    return cap, _round_up(size, cap)


def _tpu_vmem_bytes():
    """Per-TensorCore VMEM capacity; conservative 64 MiB if unknown."""
    try:
        info = pltpu.get_tpu_info()
        v = getattr(info, "vmem_capacity_bytes", None)
        if v:
            return int(v)
    except Exception:
        pass
    return 64 << 20


# ----------------------------- kernels -------------------------------------


def _maybe_cast(a, b, compute_dtype):
    if compute_dtype is not None:
        a = a.astype(compute_dtype)
        b = b.astype(compute_dtype)
    return a, b


def _hrp_kernel_single_k(x_ref, h_ref, o_ref, *, compute_dtype):
    """Fast path: the whole K dimension fits in one block."""
    a, b = _maybe_cast(x_ref[...], h_ref[...], compute_dtype)
    proj = jnp.dot(a, b, preferred_element_type=jnp.float32)
    o_ref[...] = (proj > 0).astype(o_ref.dtype)


def _hrp_kernel_multi_k_inplace(x_ref, h_ref, o_ref, *, compute_dtype):
    """K-blocked path, out_dtype == float32: accumulate straight into the
    resident output block (its block index ignores k) -> no VMEM scratch."""
    k = pl.program_id(2)

    @pl.when(k == 0)
    def _():
        o_ref[...] = jnp.zeros_like(o_ref)

    a, b = _maybe_cast(x_ref[...], h_ref[...], compute_dtype)
    o_ref[...] += jnp.dot(a, b, preferred_element_type=jnp.float32)

    @pl.when(k == pl.num_programs(2) - 1)
    def _():
        o_ref[...] = (o_ref[...] > 0).astype(o_ref.dtype)


def _hrp_kernel_multi_k_scratch(x_ref, h_ref, o_ref, acc_ref, *, compute_dtype):
    """K-blocked path with narrow out_dtype: f32 accumulator scratch."""
    k = pl.program_id(2)

    @pl.when(k == 0)
    def _():
        acc_ref[...] = jnp.zeros_like(acc_ref)

    a, b = _maybe_cast(x_ref[...], h_ref[...], compute_dtype)
    acc_ref[...] += jnp.dot(a, b, preferred_element_type=jnp.float32)

    @pl.when(k == pl.num_programs(2) - 1)
    def _():
        o_ref[...] = (acc_ref[...] > 0).astype(o_ref.dtype)


# ----------------------------- wrapper --------------------------------------


def hashed_random_projection(
    x,
    hyperplane,
    *,
    tm=None,
    tn=None,
    tk=None,
    out_dtype=jnp.float32,
    compute_dtype=None,
    split_parallel=None,
):
    """x: [M, K], hyperplane: [K, N] -> [M, N] of {0, 1} in `out_dtype`.

    compute_dtype=jnp.bfloat16 casts inside the kernel (2x MXU rate; for the
    HBM win, store the hyperplane in bf16 at rest).  out_dtype=bf16/int8 is
    exact for {0,1} and shrinks writeback traffic.
    """
    M, K = x.shape
    K2, N = hyperplane.shape
    assert K == K2, "input_size mismatch"

    x_dt = compute_dtype if compute_dtype is not None else x.dtype
    m_align = max(_sublane_align(x_dt), _sublane_align(out_dtype))

    vmem_cap = _tpu_vmem_bytes()
    small_vmem = vmem_cap <= (64 << 20) + (1 << 20)  # v7x-like: 64 MiB per TC
    if split_parallel is None:
        split_parallel = small_vmem  # v7x also has 2 TCs -> want grid >= 2

    # Generation-aware tile caps (double-buffered f32 usage ~28 MiB on
    # 128-MiB chips, ~22 MiB on 64-MiB v7x -> always fits with headroom).
    tm_cap = 256 if small_vmem else 512
    tn_cap = 1024
    tk_cap = 2048

    a_tm, Mp = _pick_dim(M, m_align, tm_cap)
    a_tn, Np = _pick_dim(N, 128, tn_cap)
    a_tk, Kp = _pick_dim(K, 128, tk_cap)

    # Explicit user overrides (fall back to padding if they don't divide).
    if tm is not None:
        a_tm, Mp = tm, _round_up(M, tm)
    if tn is not None:
        a_tn, Np = tn, _round_up(N, tn)
    if tk is not None:
        a_tk, Kp = tk, _round_up(K, tk)
    tm, tn, tk = a_tm, a_tn, a_tk

    # Dual-TC chips: make sure at least one "parallel" axis has extent >= 2.
    if split_parallel and Mp // tm == 1 and Np // tn == 1:
        if tn % 256 == 0:
            tn //= 2
        elif tm % (2 * m_align) == 0:
            tm //= 2

    # Padding (exact for K; M/N padding sliced off).  With divisor-first tile
    # selection this is the rare path, so usually zero extra HBM passes.
    if (Mp, Kp) != (M, K):
        x = jnp.pad(x, ((0, Mp - M), (0, Kp - K)))
    if (Kp, Np) != (K, N):
        hyperplane = jnp.pad(hyperplane, ((0, Kp - K), (0, Np - N)))

    grid = (Mp // tm, Np // tn, Kp // tk)
    grid_k = grid[2]

    # Cast inside the kernel only if needed -> no wrapper-side HBM pass.
    cast = None
    if compute_dtype is not None and (
        x.dtype != compute_dtype or hyperplane.dtype != compute_dtype
    ):
        cast = compute_dtype

    in_specs = [
        pl.BlockSpec((tm, tk), lambda i, j, k: (i, k)),
        pl.BlockSpec((tk, tn), lambda i, j, k: (k, j)),
    ]
    out_spec = pl.BlockSpec((tm, tn), lambda i, j, k: (i, j))

    scratch = []
    if grid_k == 1:
        kernel = functools.partial(_hrp_kernel_single_k, compute_dtype=cast)
    elif jnp.dtype(out_dtype) == jnp.dtype(jnp.float32):
        kernel = functools.partial(_hrp_kernel_multi_k_inplace, compute_dtype=cast)
    else:
        kernel = functools.partial(_hrp_kernel_multi_k_scratch, compute_dtype=cast)
        scratch = [pltpu.VMEM((tm, tn), jnp.float32)]

    # VMEM budget: double-buffered operand/output tiles + scratch, with margin.
    x_item = jnp.dtype(x.dtype).itemsize
    h_item = jnp.dtype(hyperplane.dtype).itemsize
    o_item = jnp.dtype(out_dtype).itemsize
    needed = 2 * (tm * tk * x_item + tk * tn * h_item + tm * tn * o_item)
    if scratch:
        needed += tm * tn * 4
    vmem_limit = min(
        int(0.85 * vmem_cap),
        max(32 << 20, needed + (needed >> 2) + (2 << 20)),
    )

    out = pl.pallas_call(
        kernel,
        out_shape=jax.ShapeDtypeStruct((Mp, Np), out_dtype),
        grid_spec=pltpu.PrefetchScalarGridSpec(
            num_scalar_prefetch=0,
            grid=grid,
            in_specs=in_specs,
            out_specs=out_spec,
            scratch_shapes=scratch,
        ),
        compiler_params=pltpu.CompilerParams(
            dimension_semantics=("parallel", "parallel", "arbitrary"),
            vmem_limit_bytes=vmem_limit,
        ),
    )(x, hyperplane)

    if (Mp, Np) != (M, N):
        out = out[:M, :N]
    return out


if __name__ == "__main__":
    key = jax.random.PRNGKey(0)

    def ref_fn(xx, hh):
        proj = xx @ hh
        return jnp.where(proj > 0, 1.0, 0.0).astype(jnp.float32)

    k1, k2, k3, k4 = jax.random.split(key, 4)

    # Test 1: module-like small shapes (single-K fast path, auto tiles).
    x1 = jax.random.normal(k1, (8, 128), dtype=jnp.float32)
    h1 = jax.random.normal(k2, (128, 256), dtype=jnp.float32)
    y1 = jax.block_until_ready(hashed_random_projection(x1, h1))
    assert y1.shape == (8, 256)
    assert jnp.array_equal(y1, ref_fn(x1, h1)), "mismatch (single-K path)"

    # Test 2: multi-K, f32 output -> accumulate-into-output path (2x2x2 grid).
    x2 = jax.random.normal(k3, (16, 256), dtype=jnp.float32)
    h2 = jax.random.normal(k4, (256, 256), dtype=jnp.float32)
    y2 = jax.block_until_ready(
        hashed_random_projection(x2, h2, tm=8, tn=128, tk=128)
    )
    assert y2.shape == (16, 256)
    assert jnp.array_equal(y2, ref_fn(x2, h2)), "mismatch (multi-K inplace path)"

    # Test 3: multi-K with narrow out_dtype -> scratch accumulator path.
    y2b = jax.block_until_ready(
        hashed_random_projection(
            x2, h2, tm=8, tn=128, tk=128, out_dtype=jnp.bfloat16
        )
    )
    assert y2b.shape == (16, 256)
    assert jnp.array_equal(
        y2b.astype(jnp.float32), ref_fn(x2, h2)
    ), "mismatch (multi-K scratch path)"

    # Test 4: non-divisible shapes now use full-extent blocks (no pad/slice).
    ka, kb = jax.random.split(k1)
    x3 = jax.random.normal(ka, (5, 100), dtype=jnp.float32)
    h3 = jax.random.normal(kb, (100, 200), dtype=jnp.float32)
    y3 = jax.block_until_ready(hashed_random_projection(x3, h3))
    assert y3.shape == (5, 200)
    assert jnp.array_equal(y3, ref_fn(x3, h3)), "mismatch (odd-shape path)"

    # Test 5: in-kernel bf16 compute path (smoke test: bits are {0,1}).
    y5 = jax.block_until_ready(
        hashed_random_projection(x1, h1, compute_dtype=jnp.bfloat16)
    )
    assert y5.shape == (8, 256)
    assert bool(jnp.all((y5 == 0) | (y5 == 1))), "bf16 path produced non-bits"

    print("KERNEL_OK")
</pallas_src>

<mosaic_0001>
module attributes {stable_mosaic.version = 11 : i64} {
  func.func @_hrp_kernel_single_k(%arg0: i32, %arg1: i32, %arg2: i32, %arg3: memref<8x128xf32, #tpu.memory_space<vmem>>, %arg4: memref<128x128xf32, #tpu.memory_space<vmem>>, %arg5: memref<8x128xf32, #tpu.memory_space<vmem>>) attributes {dimension_semantics = [#tpu.dimension_semantics<parallel>, #tpu.dimension_semantics<parallel>, #tpu.dimension_semantics<arbitrary>], iteration_bounds = array<i64: 1, 2, 1>, scalar_prefetch = 0 : i64, scratch_operands = 0 : i64, tpu.core_type = #tpu.core_type<tc>, window_params = [{transform_indices = @transform_0, window_bounds = array<i64: 8, 128>}, {transform_indices = @transform_1, window_bounds = array<i64: 128, 128>}, {transform_indices = @transform_2, window_bounds = array<i64: 8, 128>}]} {
    %c0 = arith.constant 0 : index
    %c0_0 = arith.constant 0 : index
    %0 = vector.load %arg3[%c0, %c0_0] : memref<8x128xf32, #tpu.memory_space<vmem>>, vector<8x128xf32>
    %c0_1 = arith.constant 0 : index
    %c0_2 = arith.constant 0 : index
    %1 = vector.load %arg4[%c0_1, %c0_2] : memref<128x128xf32, #tpu.memory_space<vmem>>, vector<128x128xf32>
    %cst = arith.constant dense<0.000000e+00> : vector<8x128xf32>
    %2 = tpu.matmul %0, %1, %cst {dimension_numbers = #tpu.dot_dimension_numbers<[1], [0], [0], [1], [0, 0, 1, 1], [], []>} : vector<8x128xf32>, vector<128x128xf32>, vector<8x128xf32> -> vector<8x128xf32>
    %cst_3 = arith.constant 0.000000e+00 : f32
    %3 = vector.broadcast %cst_3 : f32 to vector<8x128xf32>
    %4 = arith.cmpf ogt, %2, %3 : vector<8x128xf32>
    %5 = arith.extui %4 : vector<8x128xi1> to vector<8x128xi32>
    %6 = arith.sitofp %5 : vector<8x128xi32> to vector<8x128xf32>
    %c0_4 = arith.constant 0 : index
    %c0_5 = arith.constant 0 : index
    %7 = vector.load %arg5[%c0_4, %c0_5] : memref<8x128xf32, #tpu.memory_space<vmem>>, vector<8x128xf32>
    tpu.vector_store %arg5[%c0_4, %c0_5], %6 {strides = array<i32>} : memref<8x128xf32, #tpu.memory_space<vmem>>, vector<8x128xf32>,
    return
  }
  func.func @transform_0(%arg0: i32, %arg1: i32, %arg2: i32) -> (i32, i32) {
    %c0_i32 = arith.constant 0 : i32
    return %arg0, %arg2 : i32, i32
  }
  func.func @transform_1(%arg0: i32, %arg1: i32, %arg2: i32) -> (i32, i32) {
    %c0_i32 = arith.constant 0 : i32
    return %arg2, %arg1 : i32, i32
  }
  func.func @transform_2(%arg0: i32, %arg1: i32, %arg2: i32) -> (i32, i32) {
    %c0_i32 = arith.constant 0 : i32
    return %arg0, %arg1 : i32, i32
  }
}

</mosaic_0001>

<llo_original>
// kernel: tpu_custom_call.1
$region0: #{tpu_custom_call.1}
  #allocation0 [shape = 'u32[]', space=smem, size = 0x4, offset = 0x4, fixed_abs, tag = 'smem constant byte address 0x4 - core index']
  #allocation1 [shape = 'u32[72,128]{1,0:T(1,128)}', space=vmem, size = 0x9000, scoped, tag = 'internal scratch']
  %s0 = inlined_call_operand.hbm [shape: f32[8,128], index: 0, kind: input, shape index: {}]
  %s1 = inlined_call_operand.hbm [shape: f32[128,256], index: 1, kind: input, shape index: {}]
  %s2 = inlined_call_operand.hbm [shape: f32[8,256], index: 2, kind: output, shape index: {}]
  %s3 = sld [smem:[#allocation0]]
  $region49: #{tpu_custom_call.1} parent=0
    _
  %s5 = ssub.s32 1, %s3
  %s6 = scalar_select 0, %s5, %s3
  $region1: #{tpu_custom_call.1} parent=0
    #allocation2 [shape = 'u8[4096]{0}', space=vmem, size = 0x1000, scoped, tag = 'input window, operand 0, single buffered']
    #allocation3 [shape = 's32[2]{0}', space=sflag, size = 0x8, scoped, tag = 'scoped memory for tpu_custom_call.1']
    #allocation4 [shape = 's32[2]{0}', space=sflag, size = 0x8, scoped, tag = 'scoped memory for tpu_custom_call.1']
    #allocation5 [shape = 'u8[131072]{0}', space=vmem, size = 0x20000, scoped, tag = 'input window, operand 1']
    #allocation6 [shape = 's32[2]{0}', space=sflag, size = 0x8, scoped, tag = 'scoped memory for tpu_custom_call.1']
    #allocation7 [shape = 'u8[8192]{0}', space=vmem, size = 0x2000, scoped, tag = 'output window, operand 0']
    %7 = vsyncpa [#allocation3], 0
    %8 = vsyncpa [#allocation6], 0
    %s9 = scalar_lea.sflag [#allocation6], 1
    %10 = vsyncpa %s9, 0
    %11 = vsyncpa [#allocation4], 0
    %s12 = scalar_lea.sflag [#allocation4], 1
    %13 = vsyncpa %s12, 0
    loop: start=0, step=1, limit=4
    $region2: #{tpu_custom_call.1} parent=1 // loop_pre_header
      _
    $region3: #{tpu_custom_call.1} parent=1 // loop_header
      %s15 = sphi 0, %s19
      %p16 = scmp.ge.s32.totalorder %s15, 4
      %s22 = sphi 0, %s41
      %s23 = sphi 0, %s37
      %s24 = sphi 0, %s33
      %s25 = sphi 0, %s22
      %s26 = sphi 0, %s23
      %s27 = sphi 0, %s24
      %s28 = sphi 0, %s25
      %s29 = sphi 0, %s26
      %s30 = sphi 0, %s27
      %s46 = sphi 0, %s48
      %s49 = sphi 0, %s46
      %s50 = sphi 0, %s49
      %s66 = sphi 0, %s50
      %s74 = sphi 0, %s76
      %s77 = sphi 0, %s74
      %s78 = sphi 0, %s77
      %s94 = sphi 0, %s78
      %s102 = sphi 0, %s104
      %s105 = sphi 0, %s102
      %s106 = sphi 0, %s105
      %s122 = sphi 0, %s106
    $region4: #{tpu_custom_call.1} parent=1 // loop_header_branch
      %18 = sbr.rel (%p16) target = $region8
    $region5: #{tpu_custom_call.1} parent=1 // loop_body
      %s20 = ssub.s32 %s15, 1
      %s21 = ssub.s32 %s15, 2
      %s31 = sadd.s32 1, %s24
      %p32 = scmp.ge.s32.totalorder %s31, 1
      %s33 = scalar_select %p32, 0, %s31
      %s34 = sadd.s32 1, %s23
      %s35 = scalar_select %p32, %s34, %s23
      %p36 = scmp.ge.s32.totalorder %s35, 2
      %s37 = scalar_select %p36, 0, %s35
      %s38 = sadd.s32 1, %s22
      %s39 = scalar_select %p36, %s38, %s22
      %p40 = scmp.ge.s32.totalorder %s39, 1
      %s41 = scalar_select %p40, 0, %s39
      %s42 = ssub.s32 %s22, %s41
      %s43 = ssub.s32 %s24, %s33
      %s44 = sor.u32 %s42, %s43
      %p45 = scmp.eq.s32.totalorder %s44, 0
      %s47 = sadd.s32 %s46, 1
      %s48 = scalar_select %p45, %s46, %s47
      %p51 = pneg %p45
      %p52 = scmp.eq.s32.totalorder %s15, 1
      %p53 = por %p51, %p52
      %p54 = scmp.ne.s32.totalorder %s46, %s49
      %p55 = scmp.eq.s32.totalorder %s15, 0
      %p56 = por %p54, %p55
      %p57 = scmp.ne.s32.totalorder %s46, %s49
      %p58 = scmp.eq.s32.totalorder %s20, 1
      %p59 = por %p57, %p58
      %p60 = scmp.ne.s32.totalorder %s49, %s50
      %p61 = scmp.eq.s32.totalorder %s20, 0
      %p62 = por %p60, %p61
      %p63 = scmp.ne.s32.totalorder %s49, %s50
      %p64 = scmp.eq.s32.totalorder %s21, 1
      %p65 = por %p63, %p64
      %p67 = scmp.ne.s32.totalorder %s50, %s66
      %p68 = scmp.eq.s32.totalorder %s21, 0
      %p69 = por %p67, %p68
      %s70 = ssub.s32 %s24, %s33
      %s71 = ssub.s32 %s23, %s37
      %s72 = sor.u32 %s70, %s71
      %p73 = scmp.eq.s32.totalorder %s72, 0
      %s75 = sadd.s32 %s74, 1
      %s76 = scalar_select %p73, %s74, %s75
      %p79 = pneg %p73
      %p80 = scmp.eq.s32.totalorder %s15, 1
      %p81 = por %p79, %p80
      %p82 = scmp.ne.s32.totalorder %s74, %s77
      %p83 = scmp.eq.s32.totalorder %s15, 0
      %p84 = por %p82, %p83
      %p85 = scmp.ne.s32.totalorder %s74, %s77
      %p86 = scmp.eq.s32.totalorder %s20, 1
      %p87 = por %p85, %p86
      %p88 = scmp.ne.s32.totalorder %s77, %s78
      %p89 = scmp.eq.s32.totalorder %s20, 0
      %p90 = por %p88, %p89
      %p91 = scmp.ne.s32.totalorder %s77, %s78
      %p92 = scmp.eq.s32.totalorder %s21, 1
      %p93 = por %p91, %p92
      %p95 = scmp.ne.s32.totalorder %s78, %s94
      %p96 = scmp.eq.s32.totalorder %s21, 0
      %p97 = por %p95, %p96
      %s98 = ssub.s32 %s22, %s41
      %s99 = ssub.s32 %s23, %s37
      %s100 = sor.u32 %s98, %s99
      %p101 = scmp.eq.s32.totalorder %s100, 0
      %s103 = sadd.s32 %s102, 1
      %s104 = scalar_select %p101, %s102, %s103
      %p107 = pneg %p101
      %p108 = scmp.eq.s32.totalorder %s15, 1
      %p109 = por %p107, %p108
      %p110 = scmp.ne.s32.totalorder %s102, %s105
      %p111 = scmp.eq.s32.totalorder %s15, 0
      %p112 = por %p110, %p111
      %p113 = scmp.ne.s32.totalorder %s102, %s105
      %p114 = scmp.eq.s32.totalorder %s20, 1
      %p115 = por %p113, %p114
      %p116 = scmp.ne.s32.totalorder %s105, %s106
      %p117 = scmp.eq.s32.totalorder %s20, 0
      %p118 = por %p116, %p117
      %p119 = scmp.ne.s32.totalorder %s105, %s106
      %p120 = scmp.eq.s32.totalorder %s21, 1
      %p121 = por %p119, %p120
      %p123 = scmp.ne.s32.totalorder %s106, %s122
      %p124 = scmp.eq.s32.totalorder %s21, 0
      %p125 = por %p123, %p124
      %p126 = scmp.le.s32.totalorder 1, %s15
      %p127 = scmp.lt.s32.totalorder %s15, 3
      %p128 = pnand %p126, %p127
      %p129 = pneg %p128
      // Predicated region
      $region9: #{tpu_custom_call.1} parent=5 // pred_check
        _
      $region10: #{tpu_custom_call.1} parent=5 // pred_check_branch
        %131 = sbr.rel (%p128) target = $region12
      $region11: #{tpu_custom_call.1} parent=5 // pred_region
        %s132 = ssub.s32 %s15, 1
        // Predicated region
        $region13: #{tpu_custom_call.1} parent=11 // pred_check
          %p133 = pneg %p62
        $region14: #{tpu_custom_call.1} parent=11 // pred_check_branch
          %135 = sbr.rel (%p133) target = $region16
        $region15: #{tpu_custom_call.1} parent=11 // pred_region
          %137 = vsyncadd [#allocation3], 0
          %s138 = sadd.s32 %s27, %s25
          %s139 = smul.addr %s138, 8
          %s140 = scalar_lea.hbm %s0, %s139
          %s142 = sshll.u32 %s140, 4
          %s143 = int_to_ptr.hbm [resolvable:$true] %s142
          %s144 = sshll.u32 [#allocation2], 4
          %s145 = int_to_ptr.vmem [resolvable:$true] %s144
          %147 = dma.hbm_to_vmem [thread:$0]  %s143, 128, %s145, [#allocation3]
        $region16: #{tpu_custom_call.1} parent=11 // pred_fallthru
          _
      $region12: #{tpu_custom_call.1} parent=5 // pred_fallthru
        _
      %p148 = scmp.lt.s32.totalorder %s15, 2
      // Predicated region
      $region17: #{tpu_custom_call.1} parent=5 // pred_check
        %p149 = pneg %p148
      $region18: #{tpu_custom_call.1} parent=5 // pred_check_branch
        %151 = sbr.rel (%p149) target = $region20
      $region19: #{tpu_custom_call.1} parent=5 // pred_region
        // Predicated region
        $region21: #{tpu_custom_call.1} parent=19 // pred_check
          %p152 = pneg %p84
        $region22: #{tpu_custom_call.1} parent=19 // pred_check_branch
          %154 = sbr.rel (%p152) target = $region24
        $region23: #{tpu_custom_call.1} parent=19 // pred_region
          %s155 = sand.u32 %s74, 1
          %s156 = scalar_lea.sflag [#allocation6], %s155
          %s157 = sand.u32 %s74, 1
          %s158 = smul.addr %s157, 128
          %s159 = scalar_lea.vmem [#allocation5], %s158
          %s160 = smul.u32 16, %s24
          %162 = vsyncadd %s156, 0
          %s163 = smul.addr %s160, 2
          %s164 = sadd.s32 %s23, %s163
          %s165 = smul.addr %s164, 8
          %s166 = scalar_lea.hbm %s1, %s165
          %s167 = sshll.u32 %s166, 4
          %s168 = int_to_ptr.hbm [resolvable:$true] %s167
          %s169 = sshll.u32 %s159, 4
          %s170 = int_to_ptr.vmem [resolvable:$true] %s169
          %175 = dma.hbm_to_vmem [thread:$0]  %s168, 2048, %s170, %s156, 256, 128, 8
        $region24: #{tpu_custom_call.1} parent=19 // pred_fallthru
          _
      $region20: #{tpu_custom_call.1} parent=5 // pred_fallthru
        _
      %p176 = scmp.le.s32.totalorder 1, %s15
      %p177 = scmp.lt.s32.totalorder %s15, 3
      %p178 = pnand %p176, %p177
      %p179 = pneg %p178
      // Predicated region
      $region25: #{tpu_custom_call.1} parent=5 // pred_check
        _
      $region26: #{tpu_custom_call.1} parent=5 // pred_check_branch
        %181 = sbr.rel (%p178) target = $region28
      $region27: #{tpu_custom_call.1} parent=5 // pred_region
        %s182 = ssub.s32 %s15, 1
        // Predicated region
        $region29: #{tpu_custom_call.1} parent=27 // pred_check
          %p183 = pneg %p62
        $region30: #{tpu_custom_call.1} parent=27 // pred_check_branch
          %185 = sbr.rel (%p183) target = $region32
        $region31: #{tpu_custom_call.1} parent=27 // pred_region
          %187 = dma.done [#allocation3], 128
        $region32: #{tpu_custom_call.1} parent=27 // pred_fallthru
          _
        %s188 = sand.u32 %s77, 1
        %s189 = scalar_lea.sflag [#allocation6], %s188
        %s190 = sand.u32 %s77, 1
        %s191 = smul.addr %s190, 128
        %s192 = scalar_lea.vmem [#allocation5], %s191
        // Predicated region
        $region33: #{tpu_custom_call.1} parent=27 // pred_check
          %p193 = pneg %p90
        $region34: #{tpu_custom_call.1} parent=27 // pred_check_branch
          %195 = sbr.rel (%p193) target = $region36
        $region35: #{tpu_custom_call.1} parent=27 // pred_region
          %197 = dma.done %s189, 2048
        $region36: #{tpu_custom_call.1} parent=27 // pred_fallthru
          _
        %p198 = pneg %p62
        %p199 = pneg %p59
        %s200 = sand.u32 %s77, 1
        %s201 = scalar_lea.sflag [#allocation6], %s200
        %s202 = sand.u32 %s77, 1
        %s203 = smul.addr %s202, 128
        %s204 = scalar_lea.vmem [#allocation5], %s203
        %p205 = pneg %p90
        %p206 = pneg %p87
        %p207 = pneg %p118
        %p208 = pneg %p115
        %s209 = sand.u32 %s105, 1
        %s210 = scalar_lea.sflag [#allocation4], %s209
        %s211 = sand.u32 %s105, 1
        %s212 = smul.addr %s211, 8
        %s213 = scalar_lea.vmem [#allocation7], %s212
        %s214 = smul.u32 16, %s27
        %v215 = vld [vmem:[#allocation2] sm:$0xff]
        %v216 = vld [vmem:[%s192] sm:$0xff]
        %v217 = vld [vmem:[%s192 + $0x8] sm:$0xff]
        %v218 = vld [vmem:[%s192 + $0x10] sm:$0xff]
        %v219 = vld [vmem:[%s192 + $0x18] sm:$0xff]
        %v220 = vld [vmem:[%s192 + $0x20] sm:$0xff]
        %v221 = vld [vmem:[%s192 + $0x28] sm:$0xff]
        %v222 = vld [vmem:[%s192 + $0x30] sm:$0xff]
        %v223 = vld [vmem:[%s192 + $0x38] sm:$0xff]
        %v224 = vld [vmem:[%s192 + $0x40] sm:$0xff]
        %v225 = vld [vmem:[%s192 + $0x48] sm:$0xff]
        %v226 = vld [vmem:[%s192 + $0x50] sm:$0xff]
        %v227 = vld [vmem:[%s192 + $0x58] sm:$0xff]
        %v228 = vld [vmem:[%s192 + $0x60] sm:$0xff]
        %v229 = vld [vmem:[%s192 + $0x68] sm:$0xff]
        %v230 = vld [vmem:[%s192 + $0x70] sm:$0xff]
        %v231 = vld [vmem:[%s192 + $0x78] sm:$0xff]
        %232 = vmatpush.msra.mxu0 %v231
        %233 = vmatpush.msra.mxu0 %v230
        %234 = vmatpush.msra.mxu0 %v229
        %235 = vmatpush.msra.mxu0 %v228
        %236 = vmatpush.msra.mxu0 %v227
        %237 = vmatpush.msra.mxu0 %v226
        %238 = vmatpush.msra.mxu0 %v225
        %239 = vmatpush.msra.mxu0 %v224
        %240 = vmatpush.msra.mxu0 %v223
        %241 = vmatpush.msra.mxu0 %v222
        %242 = vmatpush.msra.mxu0 %v221
        %243 = vmatpush.msra.mxu0 %v220
        %244 = vmatpush.msra.mxu0 %v219
        %245 = vmatpush.msra.mxu0 %v218
        %246 = vmatpush.msra.mxu0 %v217
        %247 = vmatpush.msra.mxu0 %v216
        %248 = vmatmul.f32.gmra.mxu0 %v215
        %v249 = vpop.f32.mrf.mxu0
        %v250 = vadd.f32 0.0, %v249
        %251 = vdwg.mxu0
        %vm252 = vcmp.gt.f32.partialorder %v250, 0.0
        %v253 = vsel %vm252, 1, 0
        %v254 = vcvt.s32.f32 %v253
        %255 = vst [vmem:[%s213] sm:$0xff] %v254
        %s256 = sand.u32 %s105, 1
        %s257 = scalar_lea.sflag [#allocation4], %s256
        %s258 = sand.u32 %s105, 1
        %s259 = smul.addr %s258, 8
        %s260 = scalar_lea.vmem [#allocation7], %s259
        // Predicated region
        $region37: #{tpu_custom_call.1} parent=27 // pred_check
          %p261 = pneg %p115
        $region38: #{tpu_custom_call.1} parent=27 // pred_check_branch
          %263 = sbr.rel (%p261) target = $region40
        $region39: #{tpu_custom_call.1} parent=27 // pred_region
          %265 = vsyncadd %s257, 0
          %s266 = smul.addr %s25, 2
          %s267 = sadd.s32 %s26, %s266
          %s268 = smul.addr %s267, 8
          %s269 = scalar_lea.hbm %s2, %s268
          %s271 = sshll.u32 %s260, 4
          %s272 = int_to_ptr.vmem [resolvable:$true] %s271
          %s273 = sshll.u32 %s269, 4
          %s274 = int_to_ptr.hbm [resolvable:$true] %s273
          %276 = dma.vmem_to_hbm [thread:$0]  %s272, 128, %s274, %s257
        $region40: #{tpu_custom_call.1} parent=27 // pred_fallthru
          _
      $region28: #{tpu_custom_call.1} parent=5 // pred_fallthru
        _
      %p277 = scmp.le.s32.totalorder 2, %s15
      // Predicated region
      $region41: #{tpu_custom_call.1} parent=5 // pred_check
        %p278 = pneg %p277
      $region42: #{tpu_custom_call.1} parent=5 // pred_check_branch
        %280 = sbr.rel (%p278) target = $region44
      $region43: #{tpu_custom_call.1} parent=5 // pred_region
        %s281 = ssub.s32 %s15, 2
        // Predicated region
        $region45: #{tpu_custom_call.1} parent=43 // pred_check
          %p282 = pneg %p121
        $region46: #{tpu_custom_call.1} parent=43 // pred_check_branch
          %284 = sbr.rel (%p282) target = $region48
        $region47: #{tpu_custom_call.1} parent=43 // pred_region
          %s285 = sand.u32 %s106, 1
          %s286 = scalar_lea.sflag [#allocation4], %s285
          %s287 = sand.u32 %s106, 1
          %s288 = smul.addr %s287, 8
          %s289 = scalar_lea.vmem [#allocation7], %s288
          %291 = dma.done %s286, 128
        $region48: #{tpu_custom_call.1} parent=43 // pred_fallthru
          _
      $region44: #{tpu_custom_call.1} parent=5 // pred_fallthru
        _
    $region6: #{tpu_custom_call.1} parent=1 // loop_footer
      %s19 = sadd.s32 1, %s15
    $region7: #{tpu_custom_call.1} parent=1 // loop_footer_branch
      %14 = sbr.rel target = $region3
    $region8: #{tpu_custom_call.1} parent=1 // loop_exit
      _
    %292 = vsyncpa [#allocation3], 1
    %s293 = scalar_lea.sflag [#allocation3], 1
    %294 = vsyncpa %s293, 1
    %295 = vsyncpa [#allocation6], 1
    %s296 = scalar_lea.sflag [#allocation6], 1
    %297 = vsyncpa %s296, 1
    %298 = vsyncpa [#allocation4], 1
    %s299 = scalar_lea.sflag [#allocation4], 1
    %300 = vsyncpa %s299, 1

</llo_original>
